<compile_context>
chip_gen: v7x
topology: tpu7x:2x2x1
jax: 0.10.0
libtpu: 0.0.40
codegen_flags: <defaults>
</compile_context>

<pallas_src>
import math
import numpy as np
import jax
import jax.numpy as jnp
from jax import lax
from jax.experimental import pallas as pl
from jax.experimental.pallas import tpu as pltpu


# ---------------- mask construction (plain numpy glue, mirrors ButterflyLinear.__init__) -------
def generate_mask(mask, block_size=None):
    # TODO(synk): exact `generate_mask` source not provided; with block_size=None it is treated
    # as identity (values clipped to {0,1}), matching how the mask is consumed in forward().
    return np.clip(mask, 0.0, 1.0)


def butterfly_mask(in_features, out_features, window_size, stripes, step, block_size=None):
    pm = (min(in_features, out_features), max(in_features, out_features))
    tmp = np.zeros(pm, dtype=np.float32)
    stride = int(math.sqrt(pm[0]))
    d = math.ceil(pm[1] / pm[0])
    for k in range(stripes):
        ps = stride * k
        for i in range(0, pm[0], window_size):
            tmp[ps + i: ps + i + window_size, i * d: i * d + step * d * window_size] = 1.0
    for k in range(stripes):
        ps = stride * k
        for i in range(0, pm[0], window_size):
            tmp[i: i + window_size, (i + ps) * d: (ps + i) * d + step * d * window_size] = 1.0
    tmp = generate_mask(tmp, block_size)
    if in_features <= out_features:
        return tmp.T          # (out_features, in_features)
    return tmp                # already (out_features, in_features)


# ---------------- deterministic parameter init (mirrors reset_parameters math) ----------------
def init_butterfly_linear(key, in_f, out_f, mask):
    kw, kb = jax.random.split(key)
    # kaiming_uniform_(a=sqrt(5)) on (out_f, in_f): bound = sqrt(6 / ((1+5) * fan_in)) = 1/sqrt(fan_in)
    bound_w = 1.0 / math.sqrt(in_f)
    w = jax.random.uniform(kw, (out_f, in_f), jnp.float32, -bound_w, bound_w)
    w = w / math.sqrt(float(mask.sum()) / (in_f * out_f))
    bound_b = 1.0 / math.sqrt(in_f)
    b = jax.random.uniform(kb, (out_f,), jnp.float32, -bound_b, bound_b)
    return w, b


# ---------------- Pallas kernel: the whole MLP hot path -----------------------------------------
# x_ref    : (TM, Din)   row tile (pipelined)
# w1t_ref  : (Din, H)    mask-folded, pre-transposed fc1 weight (VMEM-resident)
# b1_ref   : (1, H)      fc1 bias (resident)
# w2t_ref  : (H, Dout)   mask-folded, pre-transposed fc2 weight (resident)
# b2_ref   : (1, Dout)   fc2 bias (resident)
# o_ref    : (TM, Dout)  output row tile (pipelined)
_INV_SQRT2 = 1.0 / math.sqrt(2.0)


def butterfly_mlp_kernel(x_ref, w1t_ref, b1_ref, w2t_ref, b2_ref, o_ref):
    x = x_ref[...]
    # fc1: h = x @ W1t + b1    (W1t already = (mask1 * W1).T, lane-major for the MXU)
    h = jnp.dot(x, w1t_ref[...], preferred_element_type=jnp.float32) + b1_ref[...]
    # exact GELU (torch nn.GELU default): 0.5 * h * (1 + erf(h / sqrt(2)))  -- erf runs on the EUP
    h = 0.5 * h * (1.0 + lax.erf(h * _INV_SQRT2))
    # dropout(p=0.0) is the identity (both in fc1->fc2 and after fc2)
    # fc2: y = h @ W2t + b2
    y = jnp.dot(h, w2t_ref[...], preferred_element_type=jnp.float32) + b2_ref[...]
    o_ref[...] = y.astype(o_ref.dtype)


def butterfly_mlp(x, w1, m1, b1, w2, m2, b2, *, tm=128):
    """x: (N, Din); w1/m1: (H, Din); b1: (H,); w2/m2: (Dout, H); b2: (Dout,)."""
    N, Din = x.shape
    H = w1.shape[0]
    Dout = w2.shape[0]

    # --- one-time wrapper-side layout plumbing (no per-step cost inside the kernel) ---
    # Fold the static 0/1 masks into the weights and pre-transpose so the kernel does
    # plain lane-major matmuls with no in-kernel mask multiply or transpose.
    w1t = (m1 * w1).T.astype(jnp.float32)          # (Din, H)
    w2t = (m2 * w2).T.astype(jnp.float32)          # (H, Dout)
    b1r = b1.reshape(1, H).astype(jnp.float32)
    b2r = b2.reshape(1, Dout).astype(jnp.float32)

    # Row-tile selection + padding so arbitrary N works (padded rows sliced off after the call).
    tm = max(8, min(tm, pl.next_power_of_2(N)))
    n_tiles = pl.cdiv(N, tm)
    n_pad = n_tiles * tm
    xp = x if n_pad == N else jnp.pad(x, ((0, n_pad - N), (0, 0)))
    grid = (n_tiles,)

    flops = 2 * n_pad * Din * H + 2 * n_pad * H * Dout
    bytes_accessed = 4 * (n_pad * Din + Din * H + H + H * Dout + Dout + n_pad * Dout)
    cost = pl.CostEstimate(flops=flops, transcendentals=n_pad * H, bytes_accessed=bytes_accessed)

    out = pl.pallas_call(
        butterfly_mlp_kernel,
        out_shape=jax.ShapeDtypeStruct((n_pad, Dout), x.dtype),
        grid=grid,
        in_specs=[
            pl.BlockSpec((tm, Din), lambda i: (i, 0)),    # x: row-tiled, double-buffered
            pl.BlockSpec((Din, H), lambda i: (0, 0)),     # W1t: resident across grid
            pl.BlockSpec((1, H), lambda i: (0, 0)),       # b1: resident
            pl.BlockSpec((H, Dout), lambda i: (0, 0)),    # W2t: resident
            pl.BlockSpec((1, Dout), lambda i: (0, 0)),    # b2: resident
        ],
        out_specs=pl.BlockSpec((tm, Dout), lambda i: (i, 0)),
        compiler_params=pltpu.CompilerParams(
            dimension_semantics=("parallel",),            # row tiles independent (2-TC on v7x)
            vmem_limit_bytes=64 * 1024 * 1024,
        ),
        cost_estimate=cost,
    )(xp, w1t, b1r, w2t, b2r)

    return out if n_pad == N else out[:N]


# ---------------- pure-JAX reference for verification -------------------------------------------
def butterfly_mlp_ref(x, w1, m1, b1, w2, m2, b2):
    h = jnp.dot(x, (m1 * w1).T, precision=lax.Precision.HIGHEST) + b1
    h = 0.5 * h * (1.0 + lax.erf(h / jnp.sqrt(2.0)))
    y = jnp.dot(h, (m2 * w2).T, precision=lax.Precision.HIGHEST) + b2
    return y


if __name__ == "__main__":
    # Small but lane-dense shapes (all feature dims multiples of 128; row tile of 128 sublanes).
    N, D_IN, D_HID, D_OUT = 256, 128, 256, 128
    WINDOW, STEP, STRIPES_1, STRIPES_2 = 3, 1, 3, 1

    key = jax.random.PRNGKey(0)
    kx, k1, k2 = jax.random.split(key, 3)

    mask1 = jnp.asarray(butterfly_mask(D_IN, D_HID, WINDOW, STRIPES_1, STEP))   # (D_HID, D_IN)
    mask2 = jnp.asarray(butterfly_mask(D_HID, D_OUT, WINDOW, STRIPES_2, STEP))  # (D_OUT, D_HID)

    w1, b1 = init_butterfly_linear(k1, D_IN, D_HID, mask1)
    w2, b2 = init_butterfly_linear(k2, D_HID, D_OUT, mask2)

    x = jax.random.normal(kx, (N, D_IN), jnp.float32)

    out = butterfly_mlp(x, w1, mask1, b1, w2, mask2, b2, tm=128)
    out = jax.block_until_ready(out)

    ref = butterfly_mlp_ref(x, w1, mask1, b1, w2, mask2, b2)
    np.testing.assert_allclose(np.asarray(out), np.asarray(ref), rtol=2e-3, atol=2e-3)

    print("KERNEL_OK")
</pallas_src>

<mosaic_0001>
module attributes {stable_mosaic.version = 11 : i64} {
  func.func @butterfly_mlp_kernel(%arg0: i32, %arg1: memref<128x128xf32, #tpu.memory_space<vmem>>, %arg2: memref<128x256xf32, #tpu.memory_space<vmem>>, %arg3: memref<1x256xf32, #tpu.memory_space<vmem>>, %arg4: memref<256x128xf32, #tpu.memory_space<vmem>>, %arg5: memref<1x128xf32, #tpu.memory_space<vmem>>, %arg6: memref<128x128xf32, #tpu.memory_space<vmem>>) attributes {dimension_semantics = [#tpu.dimension_semantics<parallel>], iteration_bounds = array<i64: 2>, scalar_prefetch = 0 : i64, scratch_operands = 0 : i64, tpu.core_type = #tpu.core_type<tc>, window_params = [{transform_indices = @transform_0, window_bounds = array<i64: 128, 128>}, {pipeline_mode = #tpu.pipeline_mode<synchronous>, transform_indices = @transform_1, window_bounds = array<i64: 128, 256>}, {pipeline_mode = #tpu.pipeline_mode<synchronous>, transform_indices = @transform_2, window_bounds = array<i64: 1, 256>}, {pipeline_mode = #tpu.pipeline_mode<synchronous>, transform_indices = @transform_3, window_bounds = array<i64: 256, 128>}, {pipeline_mode = #tpu.pipeline_mode<synchronous>, transform_indices = @transform_4, window_bounds = array<i64: 1, 128>}, {transform_indices = @transform_5, window_bounds = array<i64: 128, 128>}]} {
    %c0 = arith.constant 0 : index
    %c0_0 = arith.constant 0 : index
    %0 = vector.load %arg1[%c0, %c0_0] : memref<128x128xf32, #tpu.memory_space<vmem>>, vector<128x128xf32>
    %c0_1 = arith.constant 0 : index
    %c0_2 = arith.constant 0 : index
    %1 = vector.load %arg2[%c0_1, %c0_2] : memref<128x256xf32, #tpu.memory_space<vmem>>, vector<128x256xf32>
    %cst = arith.constant dense<0.000000e+00> : vector<128x256xf32>
    %2 = tpu.matmul %0, %1, %cst {dimension_numbers = #tpu.dot_dimension_numbers<[1], [0], [0], [1], [0, 0, 1, 1], [], []>} : vector<128x128xf32>, vector<128x256xf32>, vector<128x256xf32> -> vector<128x256xf32>
    %c0_3 = arith.constant 0 : index
    %c0_4 = arith.constant 0 : index
    %3 = vector.load %arg3[%c0_3, %c0_4] : memref<1x256xf32, #tpu.memory_space<vmem>>, vector<1x256xf32>
    %4 = vector.broadcast %3 : vector<1x256xf32> to vector<128x256xf32>
    %5 = arith.addf %2, %4 : vector<128x256xf32>
    %cst_5 = arith.constant 5.000000e-01 : f32
    %6 = vector.broadcast %cst_5 : f32 to vector<128x256xf32>
    %7 = arith.mulf %6, %5 : vector<128x256xf32>
    %cst_6 = arith.constant 0.707106769 : f32
    %8 = vector.broadcast %cst_6 : f32 to vector<128x256xf32>
    %9 = arith.mulf %5, %8 : vector<128x256xf32>
    %10 = math.erf %9 : vector<128x256xf32>
    %cst_7 = arith.constant 1.000000e+00 : f32
    %11 = vector.broadcast %cst_7 : f32 to vector<128x256xf32>
    %12 = arith.addf %11, %10 : vector<128x256xf32>
    %13 = arith.mulf %7, %12 : vector<128x256xf32>
    %c0_8 = arith.constant 0 : index
    %c0_9 = arith.constant 0 : index
    %14 = vector.load %arg4[%c0_8, %c0_9] : memref<256x128xf32, #tpu.memory_space<vmem>>, vector<256x128xf32>
    %cst_10 = arith.constant dense<0.000000e+00> : vector<128x128xf32>
    %15 = tpu.matmul %13, %14, %cst_10 {dimension_numbers = #tpu.dot_dimension_numbers<[1], [0], [0], [1], [0, 0, 1, 1], [], []>} : vector<128x256xf32>, vector<256x128xf32>, vector<128x128xf32> -> vector<128x128xf32>
    %c0_11 = arith.constant 0 : index
    %c0_12 = arith.constant 0 : index
    %16 = vector.load %arg5[%c0_11, %c0_12] : memref<1x128xf32, #tpu.memory_space<vmem>>, vector<1x128xf32>
    %17 = vector.broadcast %16 : vector<1x128xf32> to vector<128x128xf32>
    %18 = arith.addf %15, %17 : vector<128x128xf32>
    %c0_13 = arith.constant 0 : index
    %c0_14 = arith.constant 0 : index
    %19 = vector.load %arg6[%c0_13, %c0_14] : memref<128x128xf32, #tpu.memory_space<vmem>>, vector<128x128xf32>
    tpu.vector_store %arg6[%c0_13, %c0_14], %18 {strides = array<i32>} : memref<128x128xf32, #tpu.memory_space<vmem>>, vector<128x128xf32>,
    return
  }
  func.func @transform_0(%arg0: i32) -> (i32, i32) {
    %c0_i32 = arith.constant 0 : i32
    %c0_i32_0 = arith.constant 0 : i32
    return %arg0, %c0_i32 : i32, i32
  }
  func.func @transform_1(%arg0: i32) -> (i32, i32) {
    %c0_i32 = arith.constant 0 : i32
    %c0_i32_0 = arith.constant 0 : i32
    %c0_i32_1 = arith.constant 0 : i32
    return %c0_i32, %c0_i32_0 : i32, i32
  }
  func.func @transform_2(%arg0: i32) -> (i32, i32) {
    %c0_i32 = arith.constant 0 : i32
    %c0_i32_0 = arith.constant 0 : i32
    %c0_i32_1 = arith.constant 0 : i32
    return %c0_i32, %c0_i32_0 : i32, i32
  }
  func.func @transform_3(%arg0: i32) -> (i32, i32) {
    %c0_i32 = arith.constant 0 : i32
    %c0_i32_0 = arith.constant 0 : i32
    %c0_i32_1 = arith.constant 0 : i32
    return %c0_i32, %c0_i32_0 : i32, i32
  }
  func.func @transform_4(%arg0: i32) -> (i32, i32) {
    %c0_i32 = arith.constant 0 : i32
    %c0_i32_0 = arith.constant 0 : i32
    %c0_i32_1 = arith.constant 0 : i32
    return %c0_i32, %c0_i32_0 : i32, i32
  }
  func.func @transform_5(%arg0: i32) -> (i32, i32) {
    %c0_i32 = arith.constant 0 : i32
    %c0_i32_0 = arith.constant 0 : i32
    return %arg0, %c0_i32 : i32, i32
  }
}

</mosaic_0001>

<llo_original>
// kernel: tpu_custom_call.1
$region0: #{tpu_custom_call.1}
  #allocation0 [shape = 'u32[]', space=smem, size = 0x4, offset = 0x4, fixed_abs, tag = 'smem constant byte address 0x4 - core index']
  #allocation1 [shape = 'u32[144,128]{1,0:T(1,128)}', space=vmem, size = 0x12000, scoped, tag = 'internal scratch']
  %s0 = inlined_call_operand.hbm [shape: f32[256,128], index: 0, kind: input, shape index: {}]
  %s1 = inlined_call_operand.hbm [shape: f32[128,256], index: 1, kind: input, shape index: {}]
  %s2 = inlined_call_operand.hbm [shape: f32[1,256], index: 2, kind: input, shape index: {}]
  %s3 = inlined_call_operand.hbm [shape: f32[256,128], index: 3, kind: input, shape index: {}]
  %s4 = inlined_call_operand.hbm [shape: f32[1,128], index: 4, kind: input, shape index: {}]
  %s5 = inlined_call_operand.hbm [shape: f32[256,128], index: 5, kind: output, shape index: {}]
  %s6 = sld [smem:[#allocation0]]
  $region73: #{tpu_custom_call.1} parent=0
    _
  %s8 = ssub.s32 1, %s6
  %s9 = scalar_select 0, %s8, %s6
  $region1: #{tpu_custom_call.1} parent=0
    #allocation2 [shape = 'u8[131072]{0}', space=vmem, size = 0x20000, scoped, tag = 'input window, operand 0']
    #allocation3 [shape = 's32[2]{0}', space=sflag, size = 0x8, scoped, tag = 'scoped memory for tpu_custom_call.1']
    #allocation4 [shape = 's32[2]{0}', space=sflag, size = 0x8, scoped, tag = 'scoped memory for tpu_custom_call.1']
    #allocation5 [shape = 'u8[131072]{0}', space=vmem, size = 0x20000, scoped, tag = 'input window, operand 1, single buffered']
    #allocation6 [shape = 's32[1]{0}', space=sflag, size = 0x4, scoped, tag = 'scoped memory for tpu_custom_call.1']
    #allocation7 [shape = 'u8[1024]{0}', space=vmem, size = 0x400, scoped, tag = 'input window, operand 2, single buffered']
    #allocation8 [shape = 'u8[131072]{0}', space=vmem, size = 0x20000, scoped, tag = 'input window, operand 3, single buffered']
    #allocation9 [shape = 's32[1]{0}', space=sflag, size = 0x4, scoped, tag = 'scoped memory for tpu_custom_call.1']
    #allocation10 [shape = 'u8[512]{0}', space=vmem, size = 0x400, scoped, tag = 'input window, operand 4, single buffered']
    #allocation11 [shape = 'u8[131072]{0}', space=vmem, size = 0x20000, scoped, tag = 'output window, operand 0']
    %10 = vsyncpa [#allocation3], 0
    %s11 = scalar_lea.sflag [#allocation3], 1
    %12 = vsyncpa %s11, 0
    %13 = vsyncpa [#allocation6], 0
    %14 = vsyncpa [#allocation9], 0
    %15 = vsyncpa [#allocation4], 0
    %s16 = scalar_lea.sflag [#allocation4], 1
    %17 = vsyncpa %s16, 0
    loop: start=0, step=1, limit=4
    $region2: #{tpu_custom_call.1} parent=1 // loop_pre_header
      _
    $region3: #{tpu_custom_call.1} parent=1 // loop_header
      %s19 = sphi 0, %s23
      %p20 = scmp.ge.s32.totalorder %s19, 4
      %s29 = sphi 0, %s31
      %s32 = sphi 0, %s29
      %s33 = sphi 0, %s32
      %s49 = sphi 0, %s33
      %s53 = sphi 0, %s53
      %s55 = sphi 0, %s53
      %s56 = sphi 0, %s55
      %s70 = sphi 0, %s56
      %s74 = sphi 0, %s74
      %s76 = sphi 0, %s74
      %s77 = sphi 0, %s76
      %s91 = sphi 0, %s77
      %s95 = sphi 0, %s95
      %s97 = sphi 0, %s95
      %s98 = sphi 0, %s97
      %s112 = sphi 0, %s98
      %s116 = sphi 0, %s116
      %s118 = sphi 0, %s116
      %s119 = sphi 0, %s118
      %s133 = sphi 0, %s119
      %s139 = sphi 0, %s141
      %s142 = sphi 0, %s139
      %s143 = sphi 0, %s142
      %s159 = sphi 0, %s143
    $region4: #{tpu_custom_call.1} parent=1 // loop_header_branch
      %22 = sbr.rel (%p20) target = $region8
    $region5: #{tpu_custom_call.1} parent=1 // loop_body
      %s24 = ssub.s32 %s19, 1
      %s25 = ssub.s32 %s19, 2
      %s26 = sadd.s32 %s19, 1
      %s27 = ssub.s32 %s19, %s26
      %p28 = scmp.eq.s32.totalorder %s27, 0
      %s30 = sadd.s32 %s29, 1
      %s31 = scalar_select %p28, %s29, %s30
      %p34 = pneg %p28
      %p35 = scmp.eq.s32.totalorder %s19, 1
      %p36 = por %p34, %p35
      %p37 = scmp.ne.s32.totalorder %s29, %s32
      %p38 = scmp.eq.s32.totalorder %s19, 0
      %p39 = por %p37, %p38
      %p40 = scmp.ne.s32.totalorder %s29, %s32
      %p41 = scmp.eq.s32.totalorder %s24, 1
      %p42 = por %p40, %p41
      %p43 = scmp.ne.s32.totalorder %s32, %s33
      %p44 = scmp.eq.s32.totalorder %s24, 0
      %p45 = por %p43, %p44
      %p46 = scmp.ne.s32.totalorder %s32, %s33
      %p47 = scmp.eq.s32.totalorder %s25, 1
      %p48 = por %p46, %p47
      %p50 = scmp.ne.s32.totalorder %s33, %s49
      %p51 = scmp.eq.s32.totalorder %s25, 0
      %p52 = por %p50, %p51
      %s54 = sadd.s32 %s53, 1
      %p57 = scmp.eq.s32.totalorder %s19, 1
      %p58 = scmp.ne.s32.totalorder %s53, %s55
      %p59 = scmp.eq.s32.totalorder %s19, 0
      %p60 = por %p58, %p59
      %p61 = scmp.ne.s32.totalorder %s53, %s55
      %p62 = scmp.eq.s32.totalorder %s24, 1
      %p63 = por %p61, %p62
      %p64 = scmp.ne.s32.totalorder %s55, %s56
      %p65 = scmp.eq.s32.totalorder %s24, 0
      %p66 = por %p64, %p65
      %p67 = scmp.ne.s32.totalorder %s55, %s56
      %p68 = scmp.eq.s32.totalorder %s25, 1
      %p69 = por %p67, %p68
      %p71 = scmp.ne.s32.totalorder %s56, %s70
      %p72 = scmp.eq.s32.totalorder %s25, 0
      %p73 = por %p71, %p72
      %s75 = sadd.s32 %s74, 1
      %p78 = scmp.eq.s32.totalorder %s19, 1
      %p79 = scmp.ne.s32.totalorder %s74, %s76
      %p80 = scmp.eq.s32.totalorder %s19, 0
      %p81 = por %p79, %p80
      %p82 = scmp.ne.s32.totalorder %s74, %s76
      %p83 = scmp.eq.s32.totalorder %s24, 1
      %p84 = por %p82, %p83
      %p85 = scmp.ne.s32.totalorder %s76, %s77
      %p86 = scmp.eq.s32.totalorder %s24, 0
      %p87 = por %p85, %p86
      %p88 = scmp.ne.s32.totalorder %s76, %s77
      %p89 = scmp.eq.s32.totalorder %s25, 1
      %p90 = por %p88, %p89
      %p92 = scmp.ne.s32.totalorder %s77, %s91
      %p93 = scmp.eq.s32.totalorder %s25, 0
      %p94 = por %p92, %p93
      %s96 = sadd.s32 %s95, 1
      %p99 = scmp.eq.s32.totalorder %s19, 1
      %p100 = scmp.ne.s32.totalorder %s95, %s97
      %p101 = scmp.eq.s32.totalorder %s19, 0
      %p102 = por %p100, %p101
      %p103 = scmp.ne.s32.totalorder %s95, %s97
      %p104 = scmp.eq.s32.totalorder %s24, 1
      %p105 = por %p103, %p104
      %p106 = scmp.ne.s32.totalorder %s97, %s98
      %p107 = scmp.eq.s32.totalorder %s24, 0
      %p108 = por %p106, %p107
      %p109 = scmp.ne.s32.totalorder %s97, %s98
      %p110 = scmp.eq.s32.totalorder %s25, 1
      %p111 = por %p109, %p110
      %p113 = scmp.ne.s32.totalorder %s98, %s112
      %p114 = scmp.eq.s32.totalorder %s25, 0
      %p115 = por %p113, %p114
      %s117 = sadd.s32 %s116, 1
      %p120 = scmp.eq.s32.totalorder %s19, 1
      %p121 = scmp.ne.s32.totalorder %s116, %s118
      %p122 = scmp.eq.s32.totalorder %s19, 0
      %p123 = por %p121, %p122
      %p124 = scmp.ne.s32.totalorder %s116, %s118
      %p125 = scmp.eq.s32.totalorder %s24, 1
      %p126 = por %p124, %p125
      %p127 = scmp.ne.s32.totalorder %s118, %s119
      %p128 = scmp.eq.s32.totalorder %s24, 0
      %p129 = por %p127, %p128
      %p130 = scmp.ne.s32.totalorder %s118, %s119
      %p131 = scmp.eq.s32.totalorder %s25, 1
      %p132 = por %p130, %p131
      %p134 = scmp.ne.s32.totalorder %s119, %s133
      %p135 = scmp.eq.s32.totalorder %s25, 0
      %p136 = por %p134, %p135
      %s137 = ssub.s32 %s19, %s26
      %p138 = scmp.eq.s32.totalorder %s137, 0
      %s140 = sadd.s32 %s139, 1
      %s141 = scalar_select %p138, %s139, %s140
      %p144 = pneg %p138
      %p145 = scmp.eq.s32.totalorder %s19, 1
      %p146 = por %p144, %p145
      %p147 = scmp.ne.s32.totalorder %s139, %s142
      %p148 = scmp.eq.s32.totalorder %s19, 0
      %p149 = por %p147, %p148
      %p150 = scmp.ne.s32.totalorder %s139, %s142
      %p151 = scmp.eq.s32.totalorder %s24, 1
      %p152 = por %p150, %p151
      %p153 = scmp.ne.s32.totalorder %s142, %s143
      %p154 = scmp.eq.s32.totalorder %s24, 0
      %p155 = por %p153, %p154
      %p156 = scmp.ne.s32.totalorder %s142, %s143
      %p157 = scmp.eq.s32.totalorder %s25, 1
      %p158 = por %p156, %p157
      %p160 = scmp.ne.s32.totalorder %s143, %s159
      %p161 = scmp.eq.s32.totalorder %s25, 0
      %p162 = por %p160, %p161
      %p163 = scmp.le.s32.totalorder 1, %s19
      %p164 = scmp.lt.s32.totalorder %s19, 3
      %p165 = pnand %p163, %p164
      %p166 = pneg %p165
      // Predicated region
      $region9: #{tpu_custom_call.1} parent=5 // pred_check
        _
      $region10: #{tpu_custom_call.1} parent=5 // pred_check_branch
        %168 = sbr.rel (%p165) target = $region12
      $region11: #{tpu_custom_call.1} parent=5 // pred_region
        %s169 = ssub.s32 %s19, 1
        // Predicated region
        $region13: #{tpu_custom_call.1} parent=11 // pred_check
          %p170 = pneg %p66
        $region14: #{tpu_custom_call.1} parent=11 // pred_check_branch
          %172 = sbr.rel (%p170) target = $region16
        $region15: #{tpu_custom_call.1} parent=11 // pred_region
          %s174 = ssub.s32 4096, 4096
          %175 = vsyncadd [#allocation6], %s174
          %s176 = sshll.u32 [#allocation5], 4
          %s177 = int_to_ptr.vmem [resolvable:$true] %s176
          %182 = dma.hbm_to_vmem [thread:$0]  %s1, 4096, %s177, [#allocation6], 256, 256, 16
        $region16: #{tpu_custom_call.1} parent=11 // pred_fallthru
          _
        // Predicated region
        $region17: #{tpu_custom_call.1} parent=11 // pred_check
          %p183 = pneg %p87
        $region18: #{tpu_custom_call.1} parent=11 // pred_check_branch
          %185 = sbr.rel (%p183) target = $region20
        $region19: #{tpu_custom_call.1} parent=11 // pred_region
          %s187 = ssub.s32 32, 32
          %188 = vsyncadd [#allocation6], %s187
          %s190 = sshll.u32 [#allocation7], 4
          %s191 = int_to_ptr.vmem [resolvable:$true] %s190
          %193 = dma.hbm_to_vmem [thread:$0]  %s2, 32, %s191, [#allocation6]
        $region20: #{tpu_custom_call.1} parent=11 // pred_fallthru
          _
        // Predicated region
        $region21: #{tpu_custom_call.1} parent=11 // pred_check
          %p194 = pneg %p108
        $region22: #{tpu_custom_call.1} parent=11 // pred_check_branch
          %196 = sbr.rel (%p194) target = $region24
        $region23: #{tpu_custom_call.1} parent=11 // pred_region
          %s198 = ssub.s32 4096, 4096
          %199 = vsyncadd [#allocation9], %s198
          %s200 = sshll.u32 [#allocation8], 4
          %s201 = int_to_ptr.vmem [resolvable:$true] %s200
          %206 = dma.hbm_to_vmem [thread:$0]  %s3, 4096, %s201, [#allocation9], 128, 128, 8
        $region24: #{tpu_custom_call.1} parent=11 // pred_fallthru
          _
        // Predicated region
        $region25: #{tpu_custom_call.1} parent=11 // pred_check
          %p207 = pneg %p129
        $region26: #{tpu_custom_call.1} parent=11 // pred_check_branch
          %209 = sbr.rel (%p207) target = $region28
        $region27: #{tpu_custom_call.1} parent=11 // pred_region
          %s211 = ssub.s32 16, 16
          %212 = vsyncadd [#allocation9], %s211
          %s214 = sshll.u32 [#allocation10], 4
          %s215 = int_to_ptr.vmem [resolvable:$true] %s214
          %217 = dma.hbm_to_vmem [thread:$0]  %s4, 16, %s215, [#allocation9]
        $region28: #{tpu_custom_call.1} parent=11 // pred_fallthru
          _
      $region12: #{tpu_custom_call.1} parent=5 // pred_fallthru
        _
      %p218 = scmp.lt.s32.totalorder %s19, 2
      // Predicated region
      $region29: #{tpu_custom_call.1} parent=5 // pred_check
        %p219 = pneg %p218
      $region30: #{tpu_custom_call.1} parent=5 // pred_check_branch
        %221 = sbr.rel (%p219) target = $region32
      $region31: #{tpu_custom_call.1} parent=5 // pred_region
        // Predicated region
        $region33: #{tpu_custom_call.1} parent=31 // pred_check
          %p222 = pneg %p39
        $region34: #{tpu_custom_call.1} parent=31 // pred_check_branch
          %224 = sbr.rel (%p222) target = $region36
        $region35: #{tpu_custom_call.1} parent=31 // pred_region
          %s225 = sand.u32 %s29, 1
          %s226 = scalar_lea.sflag [#allocation3], %s225
          %s227 = sand.u32 %s29, 1
          %s228 = smul.addr %s227, 128
          %s229 = scalar_lea.vmem [#allocation2], %s228
          %s230 = smul.u32 16, %s19
          %s232 = ssub.s32 2048, 2048
          %233 = vsyncadd %s226, %s232
          %s234 = smul.addr %s230, 128
          %s235 = scalar_lea.hbm %s0, %s234
          %s236 = sshll.u32 %s229, 4
          %s237 = int_to_ptr.vmem [resolvable:$true] %s236
          %242 = dma.hbm_to_vmem [thread:$0]  %s235, 2048, %s237, %s226, 128, 128, 8
        $region36: #{tpu_custom_call.1} parent=31 // pred_fallthru
          _
      $region32: #{tpu_custom_call.1} parent=5 // pred_fallthru
        _
      %p243 = scmp.le.s32.totalorder 1, %s19
      %p244 = scmp.lt.s32.totalorder %s19, 3
      %p245 = pnand %p243, %p244
      %p246 = pneg %p245
      // Predicated region
      $region37: #{tpu_custom_call.1} parent=5 // pred_check
        _
      $region38: #{tpu_custom_call.1} parent=5 // pred_check_branch
        %248 = sbr.rel (%p245) target = $region40
      $region39: #{tpu_custom_call.1} parent=5 // pred_region
        %s249 = ssub.s32 %s19, 1
        %s250 = sand.u32 %s32, 1
        %s251 = scalar_lea.sflag [#allocation3], %s250
        %s252 = sand.u32 %s32, 1
        %s253 = smul.addr %s252, 128
        %s254 = scalar_lea.vmem [#allocation2], %s253
        // Predicated region
        $region41: #{tpu_custom_call.1} parent=39 // pred_check
          %p255 = pneg %p45
        $region42: #{tpu_custom_call.1} parent=39 // pred_check_branch
          %257 = sbr.rel (%p255) target = $region44
        $region43: #{tpu_custom_call.1} parent=39 // pred_region
          %258 = dma.done %s251, 2048
        $region44: #{tpu_custom_call.1} parent=39 // pred_fallthru
          _
        // Predicated region
        $region45: #{tpu_custom_call.1} parent=39 // pred_check
          %p259 = pneg %p66
        $region46: #{tpu_custom_call.1} parent=39 // pred_check_branch
          %261 = sbr.rel (%p259) target = $region48
        $region47: #{tpu_custom_call.1} parent=39 // pred_region
          %262 = dma.done [#allocation6], 4096
        $region48: #{tpu_custom_call.1} parent=39 // pred_fallthru
          _
        // Predicated region
        $region49: #{tpu_custom_call.1} parent=39 // pred_check
          %p263 = pneg %p87
        $region50: #{tpu_custom_call.1} parent=39 // pred_check_branch
          %265 = sbr.rel (%p263) target = $region52
        $region51: #{tpu_custom_call.1} parent=39 // pred_region
          %266 = dma.done [#allocation6], 32
        $region52: #{tpu_custom_call.1} parent=39 // pred_fallthru
          _
        // Predicated region
        $region53: #{tpu_custom_call.1} parent=39 // pred_check
          %p267 = pneg %p108
        $region54: #{tpu_custom_call.1} parent=39 // pred_check_branch
          %269 = sbr.rel (%p267) target = $region56
        $region55: #{tpu_custom_call.1} parent=39 // pred_region
          %270 = dma.done [#allocation9], 4096
        $region56: #{tpu_custom_call.1} parent=39 // pred_fallthru
          _
        // Predicated region
        $region57: #{tpu_custom_call.1} parent=39 // pred_check
          %p271 = pneg %p129
        $region58: #{tpu_custom_call.1} parent=39 // pred_check_branch
          %273 = sbr.rel (%p271) target = $region60
        $region59: #{tpu_custom_call.1} parent=39 // pred_region
          %274 = dma.done [#allocation9], 16
        $region60: #{tpu_custom_call.1} parent=39 // pred_fallthru
          _
        %s275 = sand.u32 %s32, 1
        %s276 = scalar_lea.sflag [#allocation3], %s275
        %s277 = sand.u32 %s32, 1
        %s278 = smul.addr %s277, 128
        %s279 = scalar_lea.vmem [#allocation2], %s278
        %p280 = pneg %p45
        %p281 = pneg %p42
        %p282 = pneg %p66
        %p283 = pneg %p63
        %p284 = pneg %p87
        %p285 = pneg %p84
        %p286 = pneg %p108
        %p287 = pneg %p105
        %p288 = pneg %p129
        %p289 = pneg %p126
        %p290 = pneg %p155
        %p291 = pneg %p152
        %s292 = sand.u32 %s142, 1
        %s293 = scalar_lea.sflag [#allocation4], %s292
        %s294 = sand.u32 %s142, 1
        %s295 = smul.addr %s294, 128
        %s296 = scalar_lea.vmem [#allocation11], %s295
        %s297 = smul.u32 16, %s24
        %s298 = smul.u32 16, %s24
        %v299 = vld [vmem:[%s254] sm:$0xff]
        %v300 = vld [vmem:[%s254 + $0x8] sm:$0xff]
        %v301 = vld [vmem:[%s254 + $0x10] sm:$0xff]
        %v302 = vld [vmem:[%s254 + $0x18] sm:$0xff]
        %v303 = vld [vmem:[%s254 + $0x20] sm:$0xff]
        %v304 = vld [vmem:[%s254 + $0x28] sm:$0xff]
        %v305 = vld [vmem:[%s254 + $0x30] sm:$0xff]
        %v306 = vld [vmem:[%s254 + $0x38] sm:$0xff]
        %v307 = vld [vmem:[%s254 + $0x40] sm:$0xff]
        %v308 = vld [vmem:[%s254 + $0x48] sm:$0xff]
        %v309 = vld [vmem:[%s254 + $0x50] sm:$0xff]
        %v310 = vld [vmem:[%s254 + $0x58] sm:$0xff]
        %v311 = vld [vmem:[%s254 + $0x60] sm:$0xff]
        %v312 = vld [vmem:[%s254 + $0x68] sm:$0xff]
        %v313 = vld [vmem:[%s254 + $0x70] sm:$0xff]
        %v314 = vld [vmem:[%s254 + $0x78] sm:$0xff]
        %v315 = vld [vmem:[#allocation5] sm:$0xff]
        %v316 = vld [vmem:[#allocation5 + $0x8] sm:$0xff]
        %v317 = vld [vmem:[#allocation5 + $0x10] sm:$0xff]
        %v318 = vld [vmem:[#allocation5 + $0x18] sm:$0xff]
        %v319 = vld [vmem:[#allocation5 + $0x20] sm:$0xff]
        %v320 = vld [vmem:[#allocation5 + $0x28] sm:$0xff]
        %v321 = vld [vmem:[#allocation5 + $0x30] sm:$0xff]
        %v322 = vld [vmem:[#allocation5 + $0x38] sm:$0xff]
        %v323 = vld [vmem:[#allocation5 + $0x40] sm:$0xff]
        %v324 = vld [vmem:[#allocation5 + $0x48] sm:$0xff]
        %v325 = vld [vmem:[#allocation5 + $0x50] sm:$0xff]
        %v326 = vld [vmem:[#allocation5 + $0x58] sm:$0xff]
        %v327 = vld [vmem:[#allocation5 + $0x60] sm:$0xff]
        %v328 = vld [vmem:[#allocation5 + $0x68] sm:$0xff]
        %v329 = vld [vmem:[#allocation5 + $0x70] sm:$0xff]
        %v330 = vld [vmem:[#allocation5 + $0x78] sm:$0xff]
        %v331 = vld [vmem:[#allocation5 + $0x80] sm:$0xff]
        %v332 = vld [vmem:[#allocation5 + $0x88] sm:$0xff]
        %v333 = vld [vmem:[#allocation5 + $0x90] sm:$0xff]
        %v334 = vld [vmem:[#allocation5 + $0x98] sm:$0xff]
        %v335 = vld [vmem:[#allocation5 + $0xa0] sm:$0xff]
        %v336 = vld [vmem:[#allocation5 + $0xa8] sm:$0xff]
        %v337 = vld [vmem:[#allocation5 + $0xb0] sm:$0xff]
        %v338 = vld [vmem:[#allocation5 + $0xb8] sm:$0xff]
        %v339 = vld [vmem:[#allocation5 + $0xc0] sm:$0xff]
        %v340 = vld [vmem:[#allocation5 + $0xc8] sm:$0xff]
        %v341 = vld [vmem:[#allocation5 + $0xd0] sm:$0xff]
        %v342 = vld [vmem:[#allocation5 + $0xd8] sm:$0xff]
        %v343 = vld [vmem:[#allocation5 + $0xe0] sm:$0xff]
        %v344 = vld [vmem:[#allocation5 + $0xe8] sm:$0xff]
        %v345 = vld [vmem:[#allocation5 + $0xf0] sm:$0xff]
        %v346 = vld [vmem:[#allocation5 + $0xf8] sm:$0xff]
        %v347 = vld [vmem:[#allocation7] sm:$0x3]
        %v349 = vlaneseq
        %v350 = vshrl.u32 %v349, 7
        %v351 = vsub.s32 0, %v350
        %v352 = vrot.slane %v347, %v351
        %v353 = vlaneseq
        %v354 = vshrl.u32 %v353, 7
        %v355 = vsub.s32 1, %v354
        %v356 = vrot.slane %v347, %v355
        %359 = vmatprep.subr.mxu0 %v316
        %360 = vmatpush1.msra.mxu0 %v315
        %361 = vmatprep.subr.mxu0 %v318
        %362 = vmatpush1.msra.mxu0 %v317
        %363 = vmatprep.subr.mxu0 %v320
        %364 = vmatpush1.msra.mxu0 %v319
        %365 = vmatprep.subr.mxu0 %v322
        %366 = vmatpush1.msra.mxu0 %v321
        %367 = vmatprep.subr.mxu0 %v324
        %368 = vmatpush1.msra.mxu0 %v323
        %369 = vmatprep.subr.mxu0 %v326
        %370 = vmatpush1.msra.mxu0 %v325
        %371 = vmatprep.subr.mxu0 %v328
        %372 = vmatpush1.msra.mxu0 %v327
        %373 = vmatprep.subr.mxu0 %v330
        %374 = vmatpush1.msra.mxu0 %v329
        %375 = vmatprep.subr.mxu0 %v332
        %376 = vmatpush1.msra.mxu0 %v331
        %377 = vmatprep.subr.mxu0 %v334
        %378 = vmatpush1.msra.mxu0 %v333
        %379 = vmatprep.subr.mxu0 %v336
        %380 = vmatpush1.msra.mxu0 %v335
        %381 = vmatprep.subr.mxu0 %v338
        %382 = vmatpush1.msra.mxu0 %v337
        %383 = vmatprep.subr.mxu0 %v340
        %384 = vmatpush1.msra.mxu0 %v339
        %385 = vmatprep.subr.mxu0 %v342
        %386 = vmatpush1.msra.mxu0 %v341
        %387 = vmatprep.subr.mxu0 %v344
        %388 = vmatpush1.msra.mxu0 %v343
        %389 = vmatprep.subr.mxu0 %v346
        %390 = vmatpush1.msra.mxu0 %v345
        %391 = vmatprep.subr.mxu0 0.0
        %392 = vmatpush1.msra.mxu0 0.0
        %393 = vmatprep.subr.mxu0 0.0
        %394 = vmatpush1.msra.mxu0 0.0
        %395 = vmatprep.subr.mxu0 0.0
        %396 = vmatpush1.msra.mxu0 0.0
        %397 = vmatprep.subr.mxu0 0.0
        %398 = vmatpush1.msra.mxu0 0.0
        %399 = vmatprep.subr.mxu0 0.0
        %400 = vmatpush1.msra.mxu0 0.0
        %401 = vmatprep.subr.mxu0 0.0
        %402 = vmatpush1.msra.mxu0 0.0
        %403 = vmatprep.subr.mxu0 0.0
        %404 = vmatpush1.msra.mxu0 0.0
        %405 = vmatprep.subr.mxu0 0.0
        %406 = vmatpush1.msra.mxu0 0.0
        %407 = vmatprep.subr.mxu0 0.0
        %408 = vmatpush1.msra.mxu0 0.0
        %409 = vmatprep.subr.mxu0 0.0
        %410 = vmatpush1.msra.mxu0 0.0
        %411 = vmatprep.subr.mxu0 0.0
        %412 = vmatpush1.msra.mxu0 0.0
        %413 = vmatprep.subr.mxu0 0.0
        %414 = vmatpush1.msra.mxu0 0.0
        %415 = vmatprep.subr.mxu0 0.0
        %416 = vmatpush1.msra.mxu0 0.0
        %417 = vmatprep.subr.mxu0 0.0
        %418 = vmatpush1.msra.mxu0 0.0
        %419 = vmatprep.subr.mxu0 0.0
        %420 = vmatpush1.msra.mxu0 0.0
        %421 = vmatprep.subr.mxu0 0.0
        %422 = vmatpush1.msra.mxu0 0.0
        %423 = vmatprep.mubr.f32.mxu0 0.0
        %424 = vmatmul.mubr.f32.gmra.mrb[0].mxu0 %v299
        %v425 = vpop.f32.mrb[0].mxu0
        %v426 = vadd.f32 %v352, %v425
        %v427 = vpop.f32.mrb[0].mxu0
        %v428 = vadd.f32 %v356, %v427
        %429 = vmatprep.mubr.f32.mxu0 0.0
        %430 = vmatmul.mubr.f32.gmra.mrb[0].mxu0 %v300
        %v431 = vpop.f32.mrb[0].mxu0
        %v432 = vadd.f32 %v352, %v431
        %v433 = vpop.f32.mrb[0].mxu0
        %v434 = vadd.f32 %v356, %v433
        %435 = vmatprep.mubr.f32.mxu0 0.0
        %436 = vmatmul.mubr.f32.gmra.mrb[0].mxu0 %v301
        %v437 = vpop.f32.mrb[0].mxu0
        %v438 = vadd.f32 %v352, %v437
        %v439 = vpop.f32.mrb[0].mxu0
        %v440 = vadd.f32 %v356, %v439
        %441 = vmatprep.mubr.f32.mxu0 0.0
        %442 = vmatmul.mubr.f32.gmra.mrb[0].mxu0 %v302
        %v443 = vpop.f32.mrb[0].mxu0
        %v444 = vadd.f32 %v352, %v443
        %v445 = vpop.f32.mrb[0].mxu0
        %v446 = vadd.f32 %v356, %v445
        %447 = vmatprep.mubr.f32.mxu0 0.0
        %448 = vmatmul.mubr.f32.gmra.mrb[0].mxu0 %v303
        %v449 = vpop.f32.mrb[0].mxu0
        %v450 = vadd.f32 %v352, %v449
        %v451 = vpop.f32.mrb[0].mxu0
        %v452 = vadd.f32 %v356, %v451
        %453 = vmatprep.mubr.f32.mxu0 0.0
        %454 = vmatmul.mubr.f32.gmra.mrb[0].mxu0 %v304
        %v455 = vpop.f32.mrb[0].mxu0
        %v456 = vadd.f32 %v352, %v455
        %v457 = vpop.f32.mrb[0].mxu0
        %v458 = vadd.f32 %v356, %v457
        %459 = vmatprep.mubr.f32.mxu0 0.0
        %460 = vmatmul.mubr.f32.gmra.mrb[0].mxu0 %v305
        %v461 = vpop.f32.mrb[0].mxu0
        %v462 = vadd.f32 %v352, %v461
        %v463 = vpop.f32.mrb[0].mxu0
        %v464 = vadd.f32 %v356, %v463
        %465 = vmatprep.mubr.f32.mxu0 0.0
        %466 = vmatmul.mubr.f32.gmra.mrb[0].mxu0 %v306
        %v467 = vpop.f32.mrb[0].mxu0
        %v468 = vadd.f32 %v352, %v467
        %v469 = vpop.f32.mrb[0].mxu0
        %v470 = vadd.f32 %v356, %v469
        %471 = vmatprep.mubr.f32.mxu0 0.0
        %472 = vmatmul.mubr.f32.gmra.mrb[0].mxu0 %v307
        %v473 = vpop.f32.mrb[0].mxu0
        %v474 = vadd.f32 %v352, %v473
        %v475 = vpop.f32.mrb[0].mxu0
        %v476 = vadd.f32 %v356, %v475
        %477 = vmatprep.mubr.f32.mxu0 0.0
        %478 = vmatmul.mubr.f32.gmra.mrb[0].mxu0 %v308
        %v479 = vpop.f32.mrb[0].mxu0
        %v480 = vadd.f32 %v352, %v479
        %v481 = vpop.f32.mrb[0].mxu0
        %v482 = vadd.f32 %v356, %v481
        %483 = vmatprep.mubr.f32.mxu0 0.0
        %484 = vmatmul.mubr.f32.gmra.mrb[0].mxu0 %v309
        %v485 = vpop.f32.mrb[0].mxu0
        %v486 = vadd.f32 %v352, %v485
        %v487 = vpop.f32.mrb[0].mxu0
        %v488 = vadd.f32 %v356, %v487
        %489 = vmatprep.mubr.f32.mxu0 0.0
        %490 = vmatmul.mubr.f32.gmra.mrb[0].mxu0 %v310
        %v491 = vpop.f32.mrb[0].mxu0
        %v492 = vadd.f32 %v352, %v491
        %v493 = vpop.f32.mrb[0].mxu0
        %v494 = vadd.f32 %v356, %v493
        %495 = vmatprep.mubr.f32.mxu0 0.0
        %496 = vmatmul.mubr.f32.gmra.mrb[0].mxu0 %v311
        %v497 = vpop.f32.mrb[0].mxu0
        %v498 = vadd.f32 %v352, %v497
        %v499 = vpop.f32.mrb[0].mxu0
        %v500 = vadd.f32 %v356, %v499
        %501 = vmatprep.mubr.f32.mxu0 0.0
        %502 = vmatmul.mubr.f32.gmra.mrb[0].mxu0 %v312
        %v503 = vpop.f32.mrb[0].mxu0
        %v504 = vadd.f32 %v352, %v503
        %v505 = vpop.f32.mrb[0].mxu0
        %v506 = vadd.f32 %v356, %v505
        %507 = vmatprep.mubr.f32.mxu0 0.0
        %508 = vmatmul.mubr.f32.gmra.mrb[0].mxu0 %v313
        %v509 = vpop.f32.mrb[0].mxu0
        %v510 = vadd.f32 %v352, %v509
        %v511 = vpop.f32.mrb[0].mxu0
        %v512 = vadd.f32 %v356, %v511
        %513 = vmatprep.mubr.f32.mxu0 0.0
        %514 = vmatmul.mubr.f32.gmra.mrb[0].mxu0 %v314
        %v515 = vpop.f32.mrb[0].mxu0
        %v516 = vadd.f32 %v352, %v515
        %v517 = vpop.f32.mrb[0].mxu0
        %v518 = vadd.f32 %v356, %v517
        %519 = vdwg.mxu0
        %v520 = vmul.f32 %v426, 0.5
        %v521 = vmul.f32 %v428, 0.5
        %v522 = vmul.f32 %v432, 0.5
        %v523 = vmul.f32 %v434, 0.5
        %v524 = vmul.f32 %v438, 0.5
        %v525 = vmul.f32 %v440, 0.5
        %v526 = vmul.f32 %v444, 0.5
        %v527 = vmul.f32 %v446, 0.5
        %v528 = vmul.f32 %v450, 0.5
        %v529 = vmul.f32 %v452, 0.5
        %v530 = vmul.f32 %v456, 0.5
        %v531 = vmul.f32 %v458, 0.5
        %v532 = vmul.f32 %v462, 0.5
        %v533 = vmul.f32 %v464, 0.5
        %v534 = vmul.f32 %v468, 0.5
        %v535 = vmul.f32 %v470, 0.5
        %v536 = vmul.f32 %v474, 0.5
        %v537 = vmul.f32 %v476, 0.5
        %v538 = vmul.f32 %v480, 0.5
        %v539 = vmul.f32 %v482, 0.5
        %v540 = vmul.f32 %v486, 0.5
        %v541 = vmul.f32 %v488, 0.5
        %v542 = vmul.f32 %v492, 0.5
        %v543 = vmul.f32 %v494, 0.5
        %v544 = vmul.f32 %v498, 0.5
        %v545 = vmul.f32 %v500, 0.5
        %v546 = vmul.f32 %v504, 0.5
        %v547 = vmul.f32 %v506, 0.5
        %v548 = vmul.f32 %v510, 0.5
        %v549 = vmul.f32 %v512, 0.5
        %v550 = vmul.f32 %v516, 0.5
        %v551 = vmul.f32 %v518, 0.5
        %v552 = vmul.f32 %v426, 0.70710677
        %v553 = vmul.f32 %v428, 0.70710677
        %v554 = vmul.f32 %v432, 0.70710677
        %v555 = vmul.f32 %v434, 0.70710677
        %v556 = vmul.f32 %v438, 0.70710677
        %v557 = vmul.f32 %v440, 0.70710677
        %v558 = vmul.f32 %v444, 0.70710677
        %v559 = vmul.f32 %v446, 0.70710677
        %v560 = vmul.f32 %v450, 0.70710677
        %v561 = vmul.f32 %v452, 0.70710677
        %v562 = vmul.f32 %v456, 0.70710677
        %v563 = vmul.f32 %v458, 0.70710677
        %v564 = vmul.f32 %v462, 0.70710677
        %v565 = vmul.f32 %v464, 0.70710677
        %v566 = vmul.f32 %v468, 0.70710677
        %v567 = vmul.f32 %v470, 0.70710677
        %v568 = vmul.f32 %v474, 0.70710677
        %v569 = vmul.f32 %v476, 0.70710677
        %v570 = vmul.f32 %v480, 0.70710677
        %v571 = vmul.f32 %v482, 0.70710677
        %v572 = vmul.f32 %v486, 0.70710677
        %v573 = vmul.f32 %v488, 0.70710677
        %v574 = vmul.f32 %v492, 0.70710677
        %v575 = vmul.f32 %v494, 0.70710677
        %v576 = vmul.f32 %v498, 0.70710677
        %v577 = vmul.f32 %v500, 0.70710677
        %v578 = vmul.f32 %v504, 0.70710677
        %v579 = vmul.f32 %v506, 0.70710677
        %v580 = vmul.f32 %v510, 0.70710677
        %v581 = vmul.f32 %v512, 0.70710677
        %v582 = vmul.f32 %v516, 0.70710677
        %v583 = vmul.f32 %v518, 0.70710677
        %v584 = verf.f32.pop %v552
        %v585 = verf.f32.pop %v553
        %v586 = verf.f32.pop %v554
        %v587 = verf.f32.pop %v555
        %v588 = verf.f32.pop %v556
        %v589 = verf.f32.pop %v557
        %v590 = verf.f32.pop %v558
        %v591 = verf.f32.pop %v559
        %v592 = verf.f32.pop %v560
        %v593 = verf.f32.pop %v561
        %v594 = verf.f32.pop %v562
        %v595 = verf.f32.pop %v563
        %v596 = verf.f32.pop %v564
        %v597 = verf.f32.pop %v565
        %v598 = verf.f32.pop %v566
        %v599 = verf.f32.pop %v567
        %v600 = verf.f32.pop %v568
        %v601 = verf.f32.pop %v569
        %v602 = verf.f32.pop %v570
        %v603 = verf.f32.pop %v571
        %v604 = verf.f32.pop %v572
        %v605 = verf.f32.pop %v573
        %v606 = verf.f32.pop %v574
        %v607 = verf.f32.pop %v575
        %v608 = verf.f32.pop %v576
        %v609 = verf.f32.pop %v577
        %v610 = verf.f32.pop %v578
        %v611 = verf.f32.pop %v579
        %v612 = verf.f32.pop %v580
        %v613 = verf.f32.pop %v581
        %v614 = verf.f32.pop %v582
        %v615 = verf.f32.pop %v583
        %v616 = vadd.f32 %v584, 1.0
        %v617 = vadd.f32 %v585, 1.0
        %v618 = vadd.f32 %v586, 1.0
        %v619 = vadd.f32 %v587, 1.0
        %v620 = vadd.f32 %v588, 1.0
        %v621 = vadd.f32 %v589, 1.0
        %v622 = vadd.f32 %v590, 1.0
        %v623 = vadd.f32 %v591, 1.0
        %v624 = vadd.f32 %v592, 1.0
        %v625 = vadd.f32 %v593, 1.0
        %v626 = vadd.f32 %v594, 1.0
        %v627 = vadd.f32 %v595, 1.0
        %v628 = vadd.f32 %v596, 1.0
        %v629 = vadd.f32 %v597, 1.0
        %v630 = vadd.f32 %v598, 1.0
        %v631 = vadd.f32 %v599, 1.0
        %v632 = vadd.f32 %v600, 1.0
        %v633 = vadd.f32 %v601, 1.0
        %v634 = vadd.f32 %v602, 1.0
        %v635 = vadd.f32 %v603, 1.0
        %v636 = vadd.f32 %v604, 1.0
        %v637 = vadd.f32 %v605, 1.0
        %v638 = vadd.f32 %v606, 1.0
        %v639 = vadd.f32 %v607, 1.0
        %v640 = vadd.f32 %v608, 1.0
        %v641 = vadd.f32 %v609, 1.0
        %v642 = vadd.f32 %v610, 1.0
        %v643 = vadd.f32 %v611, 1.0
        %v644 = vadd.f32 %v612, 1.0
        %v645 = vadd.f32 %v613, 1.0
        %v646 = vadd.f32 %v614, 1.0
        %v647 = vadd.f32 %v615, 1.0
        %v648 = vmul.f32 %v520, %v616
        %v649 = vmul.f32 %v521, %v617
        %v650 = vmul.f32 %v522, %v618
        %v651 = vmul.f32 %v523, %v619
        %v652 = vmul.f32 %v524, %v620
        %v653 = vmul.f32 %v525, %v621
        %v654 = vmul.f32 %v526, %v622
        %v655 = vmul.f32 %v527, %v623
        %v656 = vmul.f32 %v528, %v624
        %v657 = vmul.f32 %v529, %v625
        %v658 = vmul.f32 %v530, %v626
        %v659 = vmul.f32 %v531, %v627
        %v660 = vmul.f32 %v532, %v628
        %v661 = vmul.f32 %v533, %v629
        %v662 = vmul.f32 %v534, %v630
        %v663 = vmul.f32 %v535, %v631
        %v664 = vmul.f32 %v536, %v632
        %v665 = vmul.f32 %v537, %v633
        %v666 = vmul.f32 %v538, %v634
        %v667 = vmul.f32 %v539, %v635
        %v668 = vmul.f32 %v540, %v636
        %v669 = vmul.f32 %v541, %v637
        %v670 = vmul.f32 %v542, %v638
        %v671 = vmul.f32 %v543, %v639
        %v672 = vmul.f32 %v544, %v640
        %v673 = vmul.f32 %v545, %v641
        %v674 = vmul.f32 %v546, %v642
        %v675 = vmul.f32 %v547, %v643
        %v676 = vmul.f32 %v548, %v644
        %v677 = vmul.f32 %v549, %v645
        %v678 = vmul.f32 %v550, %v646
        %v679 = vmul.f32 %v551, %v647
        %v680 = vld [vmem:[#allocation8] sm:$0xff]
        %v681 = vld [vmem:[#allocation8 + $0x8] sm:$0xff]
        %v682 = vld [vmem:[#allocation8 + $0x10] sm:$0xff]
        %v683 = vld [vmem:[#allocation8 + $0x18] sm:$0xff]
        %v684 = vld [vmem:[#allocation8 + $0x20] sm:$0xff]
        %v685 = vld [vmem:[#allocation8 + $0x28] sm:$0xff]
        %v686 = vld [vmem:[#allocation8 + $0x30] sm:$0xff]
        %v687 = vld [vmem:[#allocation8 + $0x38] sm:$0xff]
        %v688 = vld [vmem:[#allocation8 + $0x40] sm:$0xff]
        %v689 = vld [vmem:[#allocation8 + $0x48] sm:$0xff]
        %v690 = vld [vmem:[#allocation8 + $0x50] sm:$0xff]
        %v691 = vld [vmem:[#allocation8 + $0x58] sm:$0xff]
        %v692 = vld [vmem:[#allocation8 + $0x60] sm:$0xff]
        %v693 = vld [vmem:[#allocation8 + $0x68] sm:$0xff]
        %v694 = vld [vmem:[#allocation8 + $0x70] sm:$0xff]
        %v695 = vld [vmem:[#allocation8 + $0x78] sm:$0xff]
        %v696 = vld [vmem:[#allocation8 + $0x80] sm:$0xff]
        %v697 = vld [vmem:[#allocation8 + $0x88] sm:$0xff]
        %v698 = vld [vmem:[#allocation8 + $0x90] sm:$0xff]
        %v699 = vld [vmem:[#allocation8 + $0x98] sm:$0xff]
        %v700 = vld [vmem:[#allocation8 + $0xa0] sm:$0xff]
        %v701 = vld [vmem:[#allocation8 + $0xa8] sm:$0xff]
        %v702 = vld [vmem:[#allocation8 + $0xb0] sm:$0xff]
        %v703 = vld [vmem:[#allocation8 + $0xb8] sm:$0xff]
        %v704 = vld [vmem:[#allocation8 + $0xc0] sm:$0xff]
        %v705 = vld [vmem:[#allocation8 + $0xc8] sm:$0xff]
        %v706 = vld [vmem:[#allocation8 + $0xd0] sm:$0xff]
        %v707 = vld [vmem:[#allocation8 + $0xd8] sm:$0xff]
        %v708 = vld [vmem:[#allocation8 + $0xe0] sm:$0xff]
        %v709 = vld [vmem:[#allocation8 + $0xe8] sm:$0xff]
        %v710 = vld [vmem:[#allocation8 + $0xf0] sm:$0xff]
        %v711 = vld [vmem:[#allocation8 + $0xf8] sm:$0xff]
        %v712 = vld [vmem:[#allocation10] sm:$0x1]
        %v714 = vlaneseq
        %v715 = vshrl.u32 %v714, 7
        %v716 = vsub.s32 0, %v715
        %v717 = vrot.slane %v712, %v716
        %719 = vmatprep.subr.mxu0 0.0
        %720 = vmatpush1.msra.mxu0 %v680
        %721 = vmatprep.subr.mxu0 0.0
        %722 = vmatpush1.msra.mxu0 %v681
        %723 = vmatprep.subr.mxu0 0.0
        %724 = vmatpush1.msra.mxu0 %v682
        %725 = vmatprep.subr.mxu0 0.0
        %726 = vmatpush1.msra.mxu0 %v683
        %727 = vmatprep.subr.mxu0 0.0
        %728 = vmatpush1.msra.mxu0 %v684
        %729 = vmatprep.subr.mxu0 0.0
        %730 = vmatpush1.msra.mxu0 %v685
        %731 = vmatprep.subr.mxu0 0.0
        %732 = vmatpush1.msra.mxu0 %v686
        %733 = vmatprep.subr.mxu0 0.0
        %734 = vmatpush1.msra.mxu0 %v687
        %735 = vmatprep.subr.mxu0 0.0
        %736 = vmatpush1.msra.mxu0 %v688
        %737 = vmatprep.subr.mxu0 0.0
        %738 = vmatpush1.msra.mxu0 %v689
        %739 = vmatprep.subr.mxu0 0.0
        %740 = vmatpush1.msra.mxu0 %v690
        %741 = vmatprep.subr.mxu0 0.0
        %742 = vmatpush1.msra.mxu0 %v691
        %743 = vmatprep.subr.mxu0 0.0
        %744 = vmatpush1.msra.mxu0 %v692
        %745 = vmatprep.subr.mxu0 0.0
        %746 = vmatpush1.msra.mxu0 %v693
        %747 = vmatprep.subr.mxu0 0.0
        %748 = vmatpush1.msra.mxu0 %v694
        %749 = vmatprep.subr.mxu0 0.0
        %750 = vmatpush1.msra.mxu0 %v695
        %751 = vmatprep.subr.mxu0 0.0
        %752 = vmatpush1.msra.mxu0 %v696
        %753 = vmatprep.subr.mxu0 0.0
        %754 = vmatpush1.msra.mxu0 %v697
        %755 = vmatprep.subr.mxu0 0.0
        %756 = vmatpush1.msra.mxu0 %v698
        %757 = vmatprep.subr.mxu0 0.0
        %758 = vmatpush1.msra.mxu0 %v699
        %759 = vmatprep.subr.mxu0 0.0
        %760 = vmatpush1.msra.mxu0 %v700
        %761 = vmatprep.subr.mxu0 0.0
        %762 = vmatpush1.msra.mxu0 %v701
        %763 = vmatprep.subr.mxu0 0.0
        %764 = vmatpush1.msra.mxu0 %v702
        %765 = vmatprep.subr.mxu0 0.0
        %766 = vmatpush1.msra.mxu0 %v703
        %767 = vmatprep.subr.mxu0 0.0
        %768 = vmatpush1.msra.mxu0 %v704
        %769 = vmatprep.subr.mxu0 0.0
        %770 = vmatpush1.msra.mxu0 %v705
        %771 = vmatprep.subr.mxu0 0.0
        %772 = vmatpush1.msra.mxu0 %v706
        %773 = vmatprep.subr.mxu0 0.0
        %774 = vmatpush1.msra.mxu0 %v707
        %775 = vmatprep.subr.mxu0 0.0
        %776 = vmatpush1.msra.mxu0 %v708
        %777 = vmatprep.subr.mxu0 0.0
        %778 = vmatpush1.msra.mxu0 %v709
        %779 = vmatprep.subr.mxu0 0.0
        %780 = vmatpush1.msra.mxu0 %v710
        %781 = vmatprep.subr.mxu0 0.0
        %782 = vmatpush1.msra.mxu0 %v711
        %783 = vmatprep.mubr.f32.mxu0 %v649
        %784 = vmatmul.mubr.f32.gmra.mrb[0].mxu0 %v648
        %v785 = vpop.f32.mrb[0].mxu0
        %v786 = vadd.f32 %v717, %v785
        %v787 = vpop.f32.mrb[0].mxu0
        %788 = vmatprep.mubr.f32.mxu0 %v651
        %789 = vmatmul.mubr.f32.gmra.mrb[0].mxu0 %v650
        %v790 = vpop.f32.mrb[0].mxu0
        %v791 = vadd.f32 %v717, %v790
        %v792 = vpop.f32.mrb[0].mxu0
        %793 = vmatprep.mubr.f32.mxu0 %v653
        %794 = vmatmul.mubr.f32.gmra.mrb[0].mxu0 %v652
        %v795 = vpop.f32.mrb[0].mxu0
        %v796 = vadd.f32 %v717, %v795
        %v797 = vpop.f32.mrb[0].mxu0
        %798 = vmatprep.mubr.f32.mxu0 %v655
        %799 = vmatmul.mubr.f32.gmra.mrb[0].mxu0 %v654
        %v800 = vpop.f32.mrb[0].mxu0
        %v801 = vadd.f32 %v717, %v800
        %v802 = vpop.f32.mrb[0].mxu0
        %803 = vmatprep.mubr.f32.mxu0 %v657
        %804 = vmatmul.mubr.f32.gmra.mrb[0].mxu0 %v656
        %v805 = vpop.f32.mrb[0].mxu0
        %v806 = vadd.f32 %v717, %v805
        %v807 = vpop.f32.mrb[0].mxu0
        %808 = vmatprep.mubr.f32.mxu0 %v659
        %809 = vmatmul.mubr.f32.gmra.mrb[0].mxu0 %v658
        %v810 = vpop.f32.mrb[0].mxu0
        %v811 = vadd.f32 %v717, %v810
        %v812 = vpop.f32.mrb[0].mxu0
        %813 = vmatprep.mubr.f32.mxu0 %v661
        %814 = vmatmul.mubr.f32.gmra.mrb[0].mxu0 %v660
        %v815 = vpop.f32.mrb[0].mxu0
        %v816 = vadd.f32 %v717, %v815
        %v817 = vpop.f32.mrb[0].mxu0
        %818 = vmatprep.mubr.f32.mxu0 %v663
        %819 = vmatmul.mubr.f32.gmra.mrb[0].mxu0 %v662
        %v820 = vpop.f32.mrb[0].mxu0
        %v821 = vadd.f32 %v717, %v820
        %v822 = vpop.f32.mrb[0].mxu0
        %823 = vmatprep.mubr.f32.mxu0 %v665
        %824 = vmatmul.mubr.f32.gmra.mrb[0].mxu0 %v664
        %v825 = vpop.f32.mrb[0].mxu0
        %v826 = vadd.f32 %v717, %v825
        %v827 = vpop.f32.mrb[0].mxu0
        %828 = vmatprep.mubr.f32.mxu0 %v667
        %829 = vmatmul.mubr.f32.gmra.mrb[0].mxu0 %v666
        %v830 = vpop.f32.mrb[0].mxu0
        %v831 = vadd.f32 %v717, %v830
        %v832 = vpop.f32.mrb[0].mxu0
        %833 = vmatprep.mubr.f32.mxu0 %v669
        %834 = vmatmul.mubr.f32.gmra.mrb[0].mxu0 %v668
        %v835 = vpop.f32.mrb[0].mxu0
        %v836 = vadd.f32 %v717, %v835
        %v837 = vpop.f32.mrb[0].mxu0
        %838 = vmatprep.mubr.f32.mxu0 %v671
        %839 = vmatmul.mubr.f32.gmra.mrb[0].mxu0 %v670
        %v840 = vpop.f32.mrb[0].mxu0
        %v841 = vadd.f32 %v717, %v840
        %v842 = vpop.f32.mrb[0].mxu0
        %843 = vmatprep.mubr.f32.mxu0 %v673
        %844 = vmatmul.mubr.f32.gmra.mrb[0].mxu0 %v672
        %v845 = vpop.f32.mrb[0].mxu0
        %v846 = vadd.f32 %v717, %v845
        %v847 = vpop.f32.mrb[0].mxu0
        %848 = vmatprep.mubr.f32.mxu0 %v675
        %849 = vmatmul.mubr.f32.gmra.mrb[0].mxu0 %v674
        %v850 = vpop.f32.mrb[0].mxu0
        %v851 = vadd.f32 %v717, %v850
        %v852 = vpop.f32.mrb[0].mxu0
        %853 = vmatprep.mubr.f32.mxu0 %v677
        %854 = vmatmul.mubr.f32.gmra.mrb[0].mxu0 %v676
        %v855 = vpop.f32.mrb[0].mxu0
        %v856 = vadd.f32 %v717, %v855
        %v857 = vpop.f32.mrb[0].mxu0
        %858 = vmatprep.mubr.f32.mxu0 %v679
        %859 = vmatmul.mubr.f32.gmra.mrb[0].mxu0 %v678
        %v860 = vpop.f32.mrb[0].mxu0
        %v861 = vadd.f32 %v717, %v860
        %v862 = vpop.f32.mrb[0].mxu0
        %863 = vdwg.mxu0
        %864 = vst [vmem:[%s296] sm:$0xff] %v786
        %865 = vst [vmem:[%s296 + $0x8] sm:$0xff] %v791
        %866 = vst [vmem:[%s296 + $0x10] sm:$0xff] %v796
        %867 = vst [vmem:[%s296 + $0x18] sm:$0xff] %v801
        %868 = vst [vmem:[%s296 + $0x20] sm:$0xff] %v806
        %869 = vst [vmem:[%s296 + $0x28] sm:$0xff] %v811
        %870 = vst [vmem:[%s296 + $0x30] sm:$0xff] %v816
        %871 = vst [vmem:[%s296 + $0x38] sm:$0xff] %v821
        %872 = vst [vmem:[%s296 + $0x40] sm:$0xff] %v826
        %873 = vst [vmem:[%s296 + $0x48] sm:$0xff] %v831
        %874 = vst [vmem:[%s296 + $0x50] sm:$0xff] %v836
        %875 = vst [vmem:[%s296 + $0x58] sm:$0xff] %v841
        %876 = vst [vmem:[%s296 + $0x60] sm:$0xff] %v846
        %877 = vst [vmem:[%s296 + $0x68] sm:$0xff] %v851
        %878 = vst [vmem:[%s296 + $0x70] sm:$0xff] %v856
        %879 = vst [vmem:[%s296 + $0x78] sm:$0xff] %v861
        %s880 = sand.u32 %s142, 1
        %s881 = scalar_lea.sflag [#allocation4], %s880
        %s882 = sand.u32 %s142, 1
        %s883 = smul.addr %s882, 128
        %s884 = scalar_lea.vmem [#allocation11], %s883
        // Predicated region
        $region61: #{tpu_custom_call.1} parent=39 // pred_check
          %p885 = pneg %p152
        $region62: #{tpu_custom_call.1} parent=39 // pred_check_branch
          %887 = sbr.rel (%p885) target = $region64
        $region63: #{tpu_custom_call.1} parent=39 // pred_region
          %s888 = smul.u32 16, %s24
          %s890 = ssub.s32 2048, 2048
          %891 = vsyncadd %s881, %s890
          %s892 = smul.addr %s888, 128
          %s893 = scalar_lea.hbm %s5, %s892
          %s894 = sshll.u32 %s884, 4
          %s895 = int_to_ptr.vmem [resolvable:$true] %s894
          %900 = dma.vmem_to_hbm [thread:$0]  %s895, 2048, %s893, %s881, 128, 128, 8
        $region64: #{tpu_custom_call.1} parent=39 // pred_fallthru
          _
      $region40: #{tpu_custom_call.1} parent=5 // pred_fallthru
        _
      %p901 = scmp.le.s32.totalorder 2, %s19
      // Predicated region
      $region65: #{tpu_custom_call.1} parent=5 // pred_check
        %p902 = pneg %p901
      $region66: #{tpu_custom_call.1} parent=5 // pred_check_branch
        %904 = sbr.rel (%p902) target = $region68
      $region67: #{tpu_custom_call.1} parent=5 // pred_region
        %s905 = ssub.s32 %s19, 2
        // Predicated region
        $region69: #{tpu_custom_call.1} parent=67 // pred_check
          %p906 = pneg %p158
        $region70: #{tpu_custom_call.1} parent=67 // pred_check_branch
          %908 = sbr.rel (%p906) target = $region72
        $region71: #{tpu_custom_call.1} parent=67 // pred_region
          %s909 = sand.u32 %s143, 1
          %s910 = scalar_lea.sflag [#allocation4], %s909
          %s911 = sand.u32 %s143, 1
          %s912 = smul.addr %s911, 128
          %s913 = scalar_lea.vmem [#allocation11], %s912
          %914 = dma.done %s910, 2048
        $region72: #{tpu_custom_call.1} parent=67 // pred_fallthru
          _
      $region68: #{tpu_custom_call.1} parent=5 // pred_fallthru
        _
    $region6: #{tpu_custom_call.1} parent=1 // loop_footer
      %s23 = sadd.s32 1, %s19
    $region7: #{tpu_custom_call.1} parent=1 // loop_footer_branch
      %18 = sbr.rel target = $region3
    $region8: #{tpu_custom_call.1} parent=1 // loop_exit
      _
    %915 = vsyncpa [#allocation3], 1
    %s916 = scalar_lea.sflag [#allocation3], 1
    %917 = vsyncpa %s916, 1
    %918 = vsyncpa [#allocation6], 1
    %919 = vsyncpa [#allocation9], 1
    %920 = vsyncpa [#allocation4], 1
    %s921 = scalar_lea.sflag [#allocation4], 1
    %922 = vsyncpa %s921, 1

</llo_original>
